<compile_context>
chip_gen: v7x
topology: tpu7x:2x2x1
jax: 0.10.0
libtpu: 0.0.40
codegen_flags: <defaults>
</compile_context>

<pallas_src>
import math

import jax
import jax.numpy as jnp
from jax.experimental import pallas as pl
from jax.experimental.pallas import tpu as pltpu


def _initial_set_kernel(eps_ref, w1p_ref, b1p_ref, w2t_ref, b2t_ref, o_ref):
    """One (batch, N-tile): out.T = W2.T @ SiLU((eps2d @ W1' + b1').T) + b2.T."""
    # (tile_n, M*D) @ (M*D, D) -> (tile_n, D), f32 accumulation on the MXU.
    h = jnp.dot(eps_ref[0], w1p_ref[...],
                preferred_element_type=jnp.float32) + b1p_ref[...]
    ht = h.T                                     # (D, tile_n) — XLU transpose
    ht = ht * jax.nn.sigmoid(ht)                 # SiLU, lane-dense
    out_t = jnp.dot(w2t_ref[...], ht,
                    preferred_element_type=jnp.float32) + b2t_ref[...]
    o_ref[0] = out_t.astype(o_ref.dtype)         # (D, tile_n) -> (B, D, N) slab


def initial_set_forward(params, eps, *, tile_n=2048, out_dtype=None):
    """eps: (B, N, M, D) -> (B, D, N), matching the PyTorch forward.

    eps is consumed in its native dtype; generate it in bf16 upstream for the
    2x input-bandwidth win (a standalone cast here would add traffic).
    """
    B, N, M, D = eps.shape
    MD = M * D
    in_dtype = eps.dtype
    if out_dtype is None:
        out_dtype = in_dtype

    # ---- fold the mixture weighting into the first Linear (tiny, in XLA) ----
    #   sum_m (eps_m*sig_m + mu_m)*w_m @ W1 + b1
    # = eps2d @ W1'  +  (sum_m w_m*mu_m) @ W1 + b1
    w = jax.nn.softmax(params["logits"].astype(jnp.float32), axis=0)    # (M,)
    scaled_sig = w[:, None] * params["sig"]                             # (M, D)
    w1p = (scaled_sig[:, :, None] * params["w1"][None]).reshape(MD, D)
    mu_bar = (w[:, None] * params["mu"]).sum(axis=0)                    # (D,)
    b1p = (mu_bar @ params["w1"] + params["b1"].reshape(-1)).reshape(1, D)
    w2t = params["w2"].T                                                # (D, D)
    b2t = params["b2"].reshape(D, 1)

    w1p = w1p.astype(in_dtype)     # weights are tiny; match eps for native MXU

    eps3d = eps.reshape(B, N, MD)  # contiguous reshape, no data movement

    # ---- N tiling: big lane-dense tiles, no wrapper-side padding ------------
    if N <= tile_n:
        tile_n = N                                   # full-dim block is legal
    else:
        tile_n = max(128, (tile_n // 128) * 128)     # lane/sublane aligned
    # keep >= ~8 total grid steps so megacore (v7x) splits evenly and the
    # pipeline has depth; only shrink while staying a multiple of 128.
    while B * pl.cdiv(N, tile_n) < 8 and tile_n >= 512 and tile_n % 256 == 0:
        tile_n //= 2

    grid = (B, pl.cdiv(N, tile_n))   # partial last tile handled by Pallas

    in_bytes = jnp.dtype(in_dtype).itemsize
    out_bytes = jnp.dtype(out_dtype).itemsize
    vmem_bytes = (2 * tile_n * MD * in_bytes            # eps tile, double-buffered
                  + 2 * D * tile_n * out_bytes          # out tile, double-buffered
                  + 2 * (MD * D * in_bytes + (D * D + 2 * D) * 4)
                  + (8 << 20))                          # headroom

    out = pl.pallas_call(
        _initial_set_kernel,
        out_shape=jax.ShapeDtypeStruct((B, D, N), out_dtype),
        grid_spec=pltpu.PrefetchScalarGridSpec(
            num_scalar_prefetch=0,
            grid=grid,
            in_specs=[
                pl.BlockSpec((1, tile_n, MD), lambda b, i: (b, i, 0)),  # eps
                pl.BlockSpec((MD, D), lambda b, i: (0, 0)),             # W1'
                pl.BlockSpec((1, D), lambda b, i: (0, 0)),              # b1'
                pl.BlockSpec((D, D), lambda b, i: (0, 0)),              # W2.T
                pl.BlockSpec((D, 1), lambda b, i: (0, 0)),              # b2.T
            ],
            out_specs=pl.BlockSpec((1, D, tile_n), lambda b, i: (b, 0, i)),
        ),
        compiler_params=pltpu.CompilerParams(
            dimension_semantics=("parallel", "parallel"),
            vmem_limit_bytes=int(vmem_bytes)),
    )(eps3d, w1p, b1p, w2t, b2t)

    return out                       # already (B, D, N); no XLA transpose pass


def initial_set_reference(params, eps):
    """Pure-JAX reference of the PyTorch forward (mixture branch)."""
    w = jax.nn.softmax(params["logits"], axis=0)
    x = (eps * params["sig"][None, None] + params["mu"][None, None]) \
        * w[None, None, :, None]
    x = x.sum(axis=2)
    h = x @ params["w1"] + params["b1"]
    h = h * jax.nn.sigmoid(h)
    out = h @ params["w2"] + params["b2"]
    return jnp.transpose(out, (0, 2, 1))


def make_params(key, dim_seed, n_mixtures):
    k_mu, k_sig, k_w1, k_b1, k_w2, k_b2 = jax.random.split(key, 6)
    bound = 1.0 / math.sqrt(dim_seed)        # nn.Linear default init bound
    return {
        "logits": jnp.ones((n_mixtures,), jnp.float32),
        "mu": jax.random.normal(k_mu, (n_mixtures, dim_seed), jnp.float32),
        "sig": jnp.abs(jax.random.normal(k_sig, (n_mixtures, dim_seed),
                                         jnp.float32)) / math.sqrt(n_mixtures),
        "w1": jax.random.uniform(k_w1, (dim_seed, dim_seed), jnp.float32, -bound, bound),
        "b1": jax.random.uniform(k_b1, (1, dim_seed), jnp.float32, -bound, bound),
        "w2": jax.random.uniform(k_w2, (dim_seed, dim_seed), jnp.float32, -bound, bound),
        "b2": jax.random.uniform(k_b2, (1, dim_seed), jnp.float32, -bound, bound),
    }


if __name__ == "__main__":
    B, N = 2, 8              # output_sizes = (B, N)
    dim_seed = 32
    n_mixtures = 4

    key = jax.random.PRNGKey(0)
    k_params, k_eps, k_eps_bf = jax.random.split(key, 3)
    params = make_params(k_params, dim_seed, n_mixtures)

    # eps plays the role of torch.randn([B, N, n_mixtures, dim_seed])
    eps = jax.random.normal(k_eps, (B, N, n_mixtures, dim_seed), jnp.float32)

    # f32 path
    ref = initial_set_reference(params, eps)
    out = jax.block_until_ready(initial_set_forward(params, eps))
    assert out.shape == (B, dim_seed, N), out.shape
    assert jnp.allclose(out, ref, rtol=1e-4, atol=1e-4), \
        float(jnp.max(jnp.abs(out - ref)))

    # bf16 path: eps generated *natively* in bf16 (no standalone wrapper cast),
    # bf16 output, f32 MXU accumulation inside the kernel.
    eps_bf = jax.random.normal(k_eps_bf, (B, N, n_mixtures, dim_seed),
                               jnp.bfloat16)
    ref_bf = initial_set_reference(params, eps_bf.astype(jnp.float32))
    out_bf = jax.block_until_ready(initial_set_forward(params, eps_bf))
    assert out_bf.shape == (B, dim_seed, N), out_bf.shape
    assert jnp.allclose(out_bf.astype(jnp.float32), ref_bf,
                        rtol=5e-2, atol=5e-2), \
        float(jnp.max(jnp.abs(out_bf.astype(jnp.float32) - ref_bf)))

    print("KERNEL_OK")
</pallas_src>

<mosaic_0001>
module attributes {stable_mosaic.version = 11 : i64} {
  func.func @_initial_set_kernel(%arg0: i32, %arg1: i32, %arg2: memref<1x8x128xf32, #tpu.memory_space<vmem>>, %arg3: memref<128x32xf32, #tpu.memory_space<vmem>>, %arg4: memref<1x32xf32, #tpu.memory_space<vmem>>, %arg5: memref<32x32xf32, #tpu.memory_space<vmem>>, %arg6: memref<32x1xf32, #tpu.memory_space<vmem>>, %arg7: memref<1x32x8xf32, #tpu.memory_space<vmem>>) attributes {dimension_semantics = [#tpu.dimension_semantics<parallel>, #tpu.dimension_semantics<parallel>], iteration_bounds = array<i64: 2, 1>, scalar_prefetch = 0 : i64, scratch_operands = 0 : i64, tpu.core_type = #tpu.core_type<tc>, window_params = [{transform_indices = @transform_0, window_bounds = array<i64: 1, 8, 128>}, {pipeline_mode = #tpu.pipeline_mode<synchronous>, transform_indices = @transform_1, window_bounds = array<i64: 128, 32>}, {pipeline_mode = #tpu.pipeline_mode<synchronous>, transform_indices = @transform_2, window_bounds = array<i64: 1, 32>}, {pipeline_mode = #tpu.pipeline_mode<synchronous>, transform_indices = @transform_3, window_bounds = array<i64: 32, 32>}, {pipeline_mode = #tpu.pipeline_mode<synchronous>, transform_indices = @transform_4, window_bounds = array<i64: 32, 1>}, {transform_indices = @transform_5, window_bounds = array<i64: 1, 32, 8>}]} {
    %c0 = arith.constant 0 : index
    %c0_0 = arith.constant 0 : index
    %c0_1 = arith.constant 0 : index
    %0 = vector.load %arg2[%c0, %c0_0, %c0_1] : memref<1x8x128xf32, #tpu.memory_space<vmem>>, vector<1x8x128xf32>
    %1 = vector.shape_cast %0 : vector<1x8x128xf32> to vector<8x128xf32>
    %c0_2 = arith.constant 0 : index
    %c0_3 = arith.constant 0 : index
    %2 = vector.load %arg3[%c0_2, %c0_3] : memref<128x32xf32, #tpu.memory_space<vmem>>, vector<128x32xf32>
    %cst = arith.constant dense<0.000000e+00> : vector<8x32xf32>
    %3 = tpu.matmul %1, %2, %cst {dimension_numbers = #tpu.dot_dimension_numbers<[1], [0], [0], [1], [0, 0, 1, 1], [], []>} : vector<8x128xf32>, vector<128x32xf32>, vector<8x32xf32> -> vector<8x32xf32>
    %c0_4 = arith.constant 0 : index
    %c0_5 = arith.constant 0 : index
    %4 = vector.load %arg4[%c0_4, %c0_5] : memref<1x32xf32, #tpu.memory_space<vmem>>, vector<1x32xf32>
    %5 = vector.broadcast %4 : vector<1x32xf32> to vector<8x32xf32>
    %6 = arith.addf %3, %5 : vector<8x32xf32>
    %7 = tpu.transpose %6, [1, 0] : vector<8x32xf32> -> vector<32x8xf32>
    %8 = arith.negf %7 : vector<32x8xf32>
    %9 = math.exp %8 : vector<32x8xf32>
    %cst_6 = arith.constant 1.000000e+00 : f32
    %10 = vector.broadcast %cst_6 : f32 to vector<32x8xf32>
    %11 = arith.addf %10, %9 : vector<32x8xf32>
    %12 = arith.divf %10, %11 : vector<32x8xf32>
    %13 = arith.mulf %7, %12 : vector<32x8xf32>
    %c0_7 = arith.constant 0 : index
    %c0_8 = arith.constant 0 : index
    %14 = vector.load %arg5[%c0_7, %c0_8] : memref<32x32xf32, #tpu.memory_space<vmem>>, vector<32x32xf32>
    %cst_9 = arith.constant dense<0.000000e+00> : vector<32x8xf32>
    %15 = tpu.matmul %14, %13, %cst_9 {dimension_numbers = #tpu.dot_dimension_numbers<[1], [0], [0], [1], [0, 0, 1, 1], [], []>} : vector<32x32xf32>, vector<32x8xf32>, vector<32x8xf32> -> vector<32x8xf32>
    %c0_10 = arith.constant 0 : index
    %c0_11 = arith.constant 0 : index
    %16 = vector.load %arg6[%c0_10, %c0_11] : memref<32x1xf32, #tpu.memory_space<vmem>>, vector<32x1xf32>
    %17 = vector.broadcast %16 : vector<32x1xf32> to vector<32x8xf32>
    %18 = arith.addf %15, %17 : vector<32x8xf32>
    %c0_12 = arith.constant 0 : index
    %c0_13 = arith.constant 0 : index
    %c0_14 = arith.constant 0 : index
    %19 = vector.load %arg7[%c0_12, %c0_13, %c0_14] : memref<1x32x8xf32, #tpu.memory_space<vmem>>, vector<1x32x8xf32>
    %20 = vector.shape_cast %19 : vector<1x32x8xf32> to vector<32x8xf32>
    %21 = vector.shape_cast %18 : vector<32x8xf32> to vector<1x32x8xf32>
    tpu.vector_store %arg7[%c0_12, %c0_13, %c0_14], %21 {strides = array<i32>} : memref<1x32x8xf32, #tpu.memory_space<vmem>>, vector<1x32x8xf32>,
    return
  }
  func.func @transform_0(%arg0: i32, %arg1: i32) -> (i32, i32, i32) {
    %c0_i32 = arith.constant 0 : i32
    %c0_i32_0 = arith.constant 0 : i32
    return %arg0, %arg1, %c0_i32 : i32, i32, i32
  }
  func.func @transform_1(%arg0: i32, %arg1: i32) -> (i32, i32) {
    %c0_i32 = arith.constant 0 : i32
    %c0_i32_0 = arith.constant 0 : i32
    %c0_i32_1 = arith.constant 0 : i32
    return %c0_i32, %c0_i32_0 : i32, i32
  }
  func.func @transform_2(%arg0: i32, %arg1: i32) -> (i32, i32) {
    %c0_i32 = arith.constant 0 : i32
    %c0_i32_0 = arith.constant 0 : i32
    %c0_i32_1 = arith.constant 0 : i32
    return %c0_i32, %c0_i32_0 : i32, i32
  }
  func.func @transform_3(%arg0: i32, %arg1: i32) -> (i32, i32) {
    %c0_i32 = arith.constant 0 : i32
    %c0_i32_0 = arith.constant 0 : i32
    %c0_i32_1 = arith.constant 0 : i32
    return %c0_i32, %c0_i32_0 : i32, i32
  }
  func.func @transform_4(%arg0: i32, %arg1: i32) -> (i32, i32) {
    %c0_i32 = arith.constant 0 : i32
    %c0_i32_0 = arith.constant 0 : i32
    %c0_i32_1 = arith.constant 0 : i32
    return %c0_i32, %c0_i32_0 : i32, i32
  }
  func.func @transform_5(%arg0: i32, %arg1: i32) -> (i32, i32, i32) {
    %c0_i32 = arith.constant 0 : i32
    %c0_i32_0 = arith.constant 0 : i32
    return %arg0, %c0_i32, %arg1 : i32, i32, i32
  }
}

</mosaic_0001>

<llo_original>
// kernel: tpu_custom_call.1
$region0: #{tpu_custom_call.1}
  #allocation0 [shape = 'u32[]', space=smem, size = 0x4, offset = 0x4, fixed_abs, tag = 'smem constant byte address 0x4 - core index']
  #allocation1 [shape = 'u32[144,128]{1,0:T(1,128)}', space=vmem, size = 0x12000, scoped, tag = 'internal scratch']
  %s0 = inlined_call_operand.vmem [shape: f32[2,8,128], index: 0, kind: input, shape index: {}]
  %s1 = inlined_call_operand.vmem [shape: f32[128,32], index: 1, kind: input, shape index: {}]
  %s2 = inlined_call_operand.vmem [shape: f32[1,32], index: 2, kind: input, shape index: {}]
  %s3 = inlined_call_operand.vmem [shape: f32[32,32], index: 3, kind: input, shape index: {}]
  %s4 = inlined_call_operand.vmem [shape: f32[32,1], index: 4, kind: input, shape index: {}]
  %s5 = inlined_call_operand.vmem [shape: f32[2,32,8], index: 5, kind: output, shape index: {}]
  %s6 = sld [smem:[#allocation0]]
  $region53: #{tpu_custom_call.1} parent=0
    _
  %s8 = ssub.s32 1, %s6
  %s9 = scalar_select 0, %s8, %s6
  loop: start=0, step=1, limit=4
  $region2: #{tpu_custom_call.1} parent=0 // loop_pre_header
    _
  $region3: #{tpu_custom_call.1} parent=0 // loop_header
    %s11 = sphi 0, %s15
    %p12 = scmp.ge.s32.totalorder %s11, 4
    %s18 = sphi 0, %s30
    %s19 = sphi 0, %s26
    %s20 = sphi 0, %s18
    %s21 = sphi 0, %s19
    %s22 = sphi 0, %s20
    %s23 = sphi 0, %s21
    %s35 = sphi 0, %s37
    %s38 = sphi 0, %s35
    %s39 = sphi 0, %s38
    %s55 = sphi 0, %s39
    %s59 = sphi 0, %s59
    %s61 = sphi 0, %s59
    %s62 = sphi 0, %s61
    %s76 = sphi 0, %s62
    %s80 = sphi 0, %s80
    %s82 = sphi 0, %s80
    %s83 = sphi 0, %s82
    %s97 = sphi 0, %s83
    %s101 = sphi 0, %s101
    %s103 = sphi 0, %s101
    %s104 = sphi 0, %s103
    %s118 = sphi 0, %s104
    %s122 = sphi 0, %s122
    %s124 = sphi 0, %s122
    %s125 = sphi 0, %s124
    %s139 = sphi 0, %s125
    %s147 = sphi 0, %s149
    %s150 = sphi 0, %s147
    %s151 = sphi 0, %s150
    %s167 = sphi 0, %s151
  $region4: #{tpu_custom_call.1} parent=0 // loop_header_branch
    %14 = sbr.rel (%p12) target = $region8
  $region5: #{tpu_custom_call.1} parent=0 // loop_body
    %s16 = ssub.s32 %s11, 1
    %s17 = ssub.s32 %s11, 2
    %s24 = sadd.s32 1, %s19
    %p25 = scmp.ge.s32.totalorder %s24, 1
    %s26 = scalar_select %p25, 0, %s24
    %s27 = sadd.s32 1, %s18
    %s28 = scalar_select %p25, %s27, %s18
    %p29 = scmp.ge.s32.totalorder %s28, 2
    %s30 = scalar_select %p29, 0, %s28
    %s31 = ssub.s32 %s18, %s30
    %s32 = ssub.s32 %s19, %s26
    %s33 = sor.u32 %s31, %s32
    %p34 = scmp.eq.s32.totalorder %s33, 0
    %s36 = sadd.s32 %s35, 1
    %s37 = scalar_select %p34, %s35, %s36
    %p40 = pneg %p34
    %p41 = scmp.eq.s32.totalorder %s11, 1
    %p42 = por %p40, %p41
    %p43 = scmp.ne.s32.totalorder %s35, %s38
    %p44 = scmp.eq.s32.totalorder %s11, 0
    %p45 = por %p43, %p44
    %p46 = scmp.ne.s32.totalorder %s35, %s38
    %p47 = scmp.eq.s32.totalorder %s16, 1
    %p48 = por %p46, %p47
    %p49 = scmp.ne.s32.totalorder %s38, %s39
    %p50 = scmp.eq.s32.totalorder %s16, 0
    %p51 = por %p49, %p50
    %p52 = scmp.ne.s32.totalorder %s38, %s39
    %p53 = scmp.eq.s32.totalorder %s17, 1
    %p54 = por %p52, %p53
    %p56 = scmp.ne.s32.totalorder %s39, %s55
    %p57 = scmp.eq.s32.totalorder %s17, 0
    %p58 = por %p56, %p57
    %s60 = sadd.s32 %s59, 1
    %p63 = scmp.eq.s32.totalorder %s11, 1
    %p64 = scmp.ne.s32.totalorder %s59, %s61
    %p65 = scmp.eq.s32.totalorder %s11, 0
    %p66 = por %p64, %p65
    %p67 = scmp.ne.s32.totalorder %s59, %s61
    %p68 = scmp.eq.s32.totalorder %s16, 1
    %p69 = por %p67, %p68
    %p70 = scmp.ne.s32.totalorder %s61, %s62
    %p71 = scmp.eq.s32.totalorder %s16, 0
    %p72 = por %p70, %p71
    %p73 = scmp.ne.s32.totalorder %s61, %s62
    %p74 = scmp.eq.s32.totalorder %s17, 1
    %p75 = por %p73, %p74
    %p77 = scmp.ne.s32.totalorder %s62, %s76
    %p78 = scmp.eq.s32.totalorder %s17, 0
    %p79 = por %p77, %p78
    %s81 = sadd.s32 %s80, 1
    %p84 = scmp.eq.s32.totalorder %s11, 1
    %p85 = scmp.ne.s32.totalorder %s80, %s82
    %p86 = scmp.eq.s32.totalorder %s11, 0
    %p87 = por %p85, %p86
    %p88 = scmp.ne.s32.totalorder %s80, %s82
    %p89 = scmp.eq.s32.totalorder %s16, 1
    %p90 = por %p88, %p89
    %p91 = scmp.ne.s32.totalorder %s82, %s83
    %p92 = scmp.eq.s32.totalorder %s16, 0
    %p93 = por %p91, %p92
    %p94 = scmp.ne.s32.totalorder %s82, %s83
    %p95 = scmp.eq.s32.totalorder %s17, 1
    %p96 = por %p94, %p95
    %p98 = scmp.ne.s32.totalorder %s83, %s97
    %p99 = scmp.eq.s32.totalorder %s17, 0
    %p100 = por %p98, %p99
    %s102 = sadd.s32 %s101, 1
    %p105 = scmp.eq.s32.totalorder %s11, 1
    %p106 = scmp.ne.s32.totalorder %s101, %s103
    %p107 = scmp.eq.s32.totalorder %s11, 0
    %p108 = por %p106, %p107
    %p109 = scmp.ne.s32.totalorder %s101, %s103
    %p110 = scmp.eq.s32.totalorder %s16, 1
    %p111 = por %p109, %p110
    %p112 = scmp.ne.s32.totalorder %s103, %s104
    %p113 = scmp.eq.s32.totalorder %s16, 0
    %p114 = por %p112, %p113
    %p115 = scmp.ne.s32.totalorder %s103, %s104
    %p116 = scmp.eq.s32.totalorder %s17, 1
    %p117 = por %p115, %p116
    %p119 = scmp.ne.s32.totalorder %s104, %s118
    %p120 = scmp.eq.s32.totalorder %s17, 0
    %p121 = por %p119, %p120
    %s123 = sadd.s32 %s122, 1
    %p126 = scmp.eq.s32.totalorder %s11, 1
    %p127 = scmp.ne.s32.totalorder %s122, %s124
    %p128 = scmp.eq.s32.totalorder %s11, 0
    %p129 = por %p127, %p128
    %p130 = scmp.ne.s32.totalorder %s122, %s124
    %p131 = scmp.eq.s32.totalorder %s16, 1
    %p132 = por %p130, %p131
    %p133 = scmp.ne.s32.totalorder %s124, %s125
    %p134 = scmp.eq.s32.totalorder %s16, 0
    %p135 = por %p133, %p134
    %p136 = scmp.ne.s32.totalorder %s124, %s125
    %p137 = scmp.eq.s32.totalorder %s17, 1
    %p138 = por %p136, %p137
    %p140 = scmp.ne.s32.totalorder %s125, %s139
    %p141 = scmp.eq.s32.totalorder %s17, 0
    %p142 = por %p140, %p141
    %s143 = ssub.s32 %s18, %s30
    %s144 = ssub.s32 %s19, %s26
    %s145 = sor.u32 %s143, %s144
    %p146 = scmp.eq.s32.totalorder %s145, 0
    %s148 = sadd.s32 %s147, 1
    %s149 = scalar_select %p146, %s147, %s148
    %p152 = pneg %p146
    %p153 = scmp.eq.s32.totalorder %s11, 1
    %p154 = por %p152, %p153
    %p155 = scmp.ne.s32.totalorder %s147, %s150
    %p156 = scmp.eq.s32.totalorder %s11, 0
    %p157 = por %p155, %p156
    %p158 = scmp.ne.s32.totalorder %s147, %s150
    %p159 = scmp.eq.s32.totalorder %s16, 1
    %p160 = por %p158, %p159
    %p161 = scmp.ne.s32.totalorder %s150, %s151
    %p162 = scmp.eq.s32.totalorder %s16, 0
    %p163 = por %p161, %p162
    %p164 = scmp.ne.s32.totalorder %s150, %s151
    %p165 = scmp.eq.s32.totalorder %s17, 1
    %p166 = por %p164, %p165
    %p168 = scmp.ne.s32.totalorder %s151, %s167
    %p169 = scmp.eq.s32.totalorder %s17, 0
    %p170 = por %p168, %p169
    %p171 = scmp.le.s32.totalorder 1, %s11
    %p172 = scmp.lt.s32.totalorder %s11, 3
    %p173 = pnand %p171, %p172
    %p174 = pneg %p173
    // Predicated region
    $region9: #{tpu_custom_call.1} parent=5 // pred_check
      _
    $region10: #{tpu_custom_call.1} parent=5 // pred_check_branch
      %176 = sbr.rel (%p173) target = $region12
    $region11: #{tpu_custom_call.1} parent=5 // pred_region
      %s177 = ssub.s32 %s11, 1
      // Predicated region
      $region13: #{tpu_custom_call.1} parent=11 // pred_check
        %p178 = pneg %p72
      $region14: #{tpu_custom_call.1} parent=11 // pred_check_branch
        %180 = sbr.rel (%p178) target = $region16
      $region15: #{tpu_custom_call.1} parent=11 // pred_region
        _
      $region16: #{tpu_custom_call.1} parent=11 // pred_fallthru
        _
      // Predicated region
      $region17: #{tpu_custom_call.1} parent=11 // pred_check
        %p181 = pneg %p93
      $region18: #{tpu_custom_call.1} parent=11 // pred_check_branch
        %183 = sbr.rel (%p181) target = $region20
      $region19: #{tpu_custom_call.1} parent=11 // pred_region
        _
      $region20: #{tpu_custom_call.1} parent=11 // pred_fallthru
        _
      // Predicated region
      $region21: #{tpu_custom_call.1} parent=11 // pred_check
        %p184 = pneg %p114
      $region22: #{tpu_custom_call.1} parent=11 // pred_check_branch
        %186 = sbr.rel (%p184) target = $region24
      $region23: #{tpu_custom_call.1} parent=11 // pred_region
        _
      $region24: #{tpu_custom_call.1} parent=11 // pred_fallthru
        _
      // Predicated region
      $region25: #{tpu_custom_call.1} parent=11 // pred_check
        %p187 = pneg %p135
      $region26: #{tpu_custom_call.1} parent=11 // pred_check_branch
        %189 = sbr.rel (%p187) target = $region28
      $region27: #{tpu_custom_call.1} parent=11 // pred_region
        _
      $region28: #{tpu_custom_call.1} parent=11 // pred_fallthru
        _
    $region12: #{tpu_custom_call.1} parent=5 // pred_fallthru
      _
    %p190 = scmp.lt.s32.totalorder %s11, 2
    // Predicated region
    $region29: #{tpu_custom_call.1} parent=5 // pred_check
      %p191 = pneg %p190
    $region30: #{tpu_custom_call.1} parent=5 // pred_check_branch
      %193 = sbr.rel (%p191) target = $region32
    $region31: #{tpu_custom_call.1} parent=5 // pred_region
      // Predicated region
      $region33: #{tpu_custom_call.1} parent=31 // pred_check
        %p194 = pneg %p45
      $region34: #{tpu_custom_call.1} parent=31 // pred_check_branch
        %196 = sbr.rel (%p194) target = $region36
      $region35: #{tpu_custom_call.1} parent=31 // pred_region
        %p197 = scmp.lt.s32.totalorder %s18, 1
        %s198 = scalar_select %p197, %s18, 1
        %p199 = scmp.lt.s32.totalorder %s19, 0
        %s200 = scalar_select %p199, %s19, 0
        %s201 = sadd.s32 %s200, %s198
        %s202 = smul.addr %s201, 8
        %s203 = scalar_lea.vmem %s0, %s202
      $region36: #{tpu_custom_call.1} parent=31 // pred_fallthru
        _
    $region32: #{tpu_custom_call.1} parent=5 // pred_fallthru
      _
    %p204 = scmp.le.s32.totalorder 1, %s11
    %p205 = scmp.lt.s32.totalorder %s11, 3
    %p206 = pnand %p204, %p205
    %p207 = pneg %p206
    // Predicated region
    $region37: #{tpu_custom_call.1} parent=5 // pred_check
      _
    $region38: #{tpu_custom_call.1} parent=5 // pred_check_branch
      %209 = sbr.rel (%p206) target = $region40
    $region39: #{tpu_custom_call.1} parent=5 // pred_region
      %s210 = ssub.s32 %s11, 1
      %p211 = scmp.lt.s32.totalorder %s20, 1
      %s212 = scalar_select %p211, %s20, 1
      %p213 = scmp.lt.s32.totalorder %s21, 0
      %s214 = scalar_select %p213, %s21, 0
      %s215 = sadd.s32 %s214, %s212
      %s216 = smul.addr %s215, 8
      %s217 = scalar_lea.vmem %s0, %s216
      %p218 = pneg %p51
      %p219 = pneg %p48
      %p220 = pneg %p72
      %p221 = pneg %p69
      %p222 = pneg %p93
      %p223 = pneg %p90
      %p224 = pneg %p114
      %p225 = pneg %p111
      %p226 = pneg %p135
      %p227 = pneg %p132
      %p228 = pneg %p163
      %p229 = pneg %p160
      %p230 = scmp.lt.s32.totalorder %s20, 1
      %s231 = scalar_select %p230, %s20, 1
      %p232 = scmp.lt.s32.totalorder %s21, 0
      %s233 = scalar_select %p232, %s21, 0
      %s234 = smul.addr %s231, 4
      %s235 = sadd.s32 %s233, %s234
      %s236 = smul.addr %s235, 8
      %s237 = scalar_lea.vmem %s5, %s236
      %p238 = scmp.lt.s32.totalorder %s20, 1
      %s239 = scalar_select %p238, %s20, 1
      %p240 = scmp.lt.s32.totalorder %s21, 0
      %s241 = scalar_select %p240, %s21, 0
      %s242 = sadd.s32 %s241, %s239
      %s243 = smul.addr %s242, 8
      %s244 = scalar_lea.vmem %s0, %s243
      %p245 = scmp.lt.s32.totalorder %s20, 1
      %s246 = scalar_select %p245, %s20, 1
      %p247 = scmp.lt.s32.totalorder %s21, 0
      %s248 = scalar_select %p247, %s21, 0
      %s249 = smul.addr %s246, 4
      %s250 = sadd.s32 %s248, %s249
      %s251 = smul.addr %s250, 8
      %s252 = scalar_lea.vmem %s5, %s251
      %v253 = vld [vmem:[%s244] sm:$0xff]
      %v254 = vld [vmem:[%s1] sm:$0xff]
      %v255 = vld [vmem:[%s1 + $0x8] sm:$0xff]
      %v256 = vld [vmem:[%s1 + $0x10] sm:$0xff]
      %v257 = vld [vmem:[%s1 + $0x18] sm:$0xff]
      %v258 = vld [vmem:[%s1 + $0x20] sm:$0xff]
      %v259 = vld [vmem:[%s1 + $0x28] sm:$0xff]
      %v260 = vld [vmem:[%s1 + $0x30] sm:$0xff]
      %v261 = vld [vmem:[%s1 + $0x38] sm:$0xff]
      %v262 = vld [vmem:[%s1 + $0x40] sm:$0xff]
      %v263 = vld [vmem:[%s1 + $0x48] sm:$0xff]
      %v264 = vld [vmem:[%s1 + $0x50] sm:$0xff]
      %v265 = vld [vmem:[%s1 + $0x58] sm:$0xff]
      %v266 = vld [vmem:[%s1 + $0x60] sm:$0xff]
      %v267 = vld [vmem:[%s1 + $0x68] sm:$0xff]
      %v268 = vld [vmem:[%s1 + $0x70] sm:$0xff]
      %v269 = vld [vmem:[%s1 + $0x78] sm:$0xff]
      %v270 = vld [vmem:[%s2] sm:$0x1]
      %v272 = vlaneseq
      %v273 = vshrl.u32 %v272, 7
      %v274 = vsub.s32 0, %v273
      %v275 = vrot.slane %v270, %v274
      %277 = vmatprep.subr.mxu0 0.0
      %278 = vmatpush1.msra.mxu0 %v254
      %279 = vmatprep.subr.mxu0 0.0
      %280 = vmatpush1.msra.mxu0 %v255
      %281 = vmatprep.subr.mxu0 0.0
      %282 = vmatpush1.msra.mxu0 %v256
      %283 = vmatprep.subr.mxu0 0.0
      %284 = vmatpush1.msra.mxu0 %v257
      %285 = vmatprep.subr.mxu0 0.0
      %286 = vmatpush1.msra.mxu0 %v258
      %287 = vmatprep.subr.mxu0 0.0
      %288 = vmatpush1.msra.mxu0 %v259
      %289 = vmatprep.subr.mxu0 0.0
      %290 = vmatpush1.msra.mxu0 %v260
      %291 = vmatprep.subr.mxu0 0.0
      %292 = vmatpush1.msra.mxu0 %v261
      %293 = vmatprep.subr.mxu0 0.0
      %294 = vmatpush1.msra.mxu0 %v262
      %295 = vmatprep.subr.mxu0 0.0
      %296 = vmatpush1.msra.mxu0 %v263
      %297 = vmatprep.subr.mxu0 0.0
      %298 = vmatpush1.msra.mxu0 %v264
      %299 = vmatprep.subr.mxu0 0.0
      %300 = vmatpush1.msra.mxu0 %v265
      %301 = vmatprep.subr.mxu0 0.0
      %302 = vmatpush1.msra.mxu0 %v266
      %303 = vmatprep.subr.mxu0 0.0
      %304 = vmatpush1.msra.mxu0 %v267
      %305 = vmatprep.subr.mxu0 0.0
      %306 = vmatpush1.msra.mxu0 %v268
      %307 = vmatprep.subr.mxu0 0.0
      %308 = vmatpush1.msra.mxu0 %v269
      %309 = vmatprep.subr.mxu0 0.0
      %310 = vmatpush1.msra.mxu0 0.0
      %311 = vmatprep.subr.mxu0 0.0
      %312 = vmatpush1.msra.mxu0 0.0
      %313 = vmatprep.subr.mxu0 0.0
      %314 = vmatpush1.msra.mxu0 0.0
      %315 = vmatprep.subr.mxu0 0.0
      %316 = vmatpush1.msra.mxu0 0.0
      %317 = vmatprep.subr.mxu0 0.0
      %318 = vmatpush1.msra.mxu0 0.0
      %319 = vmatprep.subr.mxu0 0.0
      %320 = vmatpush1.msra.mxu0 0.0
      %321 = vmatprep.subr.mxu0 0.0
      %322 = vmatpush1.msra.mxu0 0.0
      %323 = vmatprep.subr.mxu0 0.0
      %324 = vmatpush1.msra.mxu0 0.0
      %325 = vmatprep.subr.mxu0 0.0
      %326 = vmatpush1.msra.mxu0 0.0
      %327 = vmatprep.subr.mxu0 0.0
      %328 = vmatpush1.msra.mxu0 0.0
      %329 = vmatprep.subr.mxu0 0.0
      %330 = vmatpush1.msra.mxu0 0.0
      %331 = vmatprep.subr.mxu0 0.0
      %332 = vmatpush1.msra.mxu0 0.0
      %333 = vmatprep.subr.mxu0 0.0
      %334 = vmatpush1.msra.mxu0 0.0
      %335 = vmatprep.subr.mxu0 0.0
      %336 = vmatpush1.msra.mxu0 0.0
      %337 = vmatprep.subr.mxu0 0.0
      %338 = vmatpush1.msra.mxu0 0.0
      %339 = vmatprep.subr.mxu0 0.0
      %340 = vmatpush1.msra.mxu0 0.0
      %341 = vmatprep.mubr.f32.mxu0 0.0
      %342 = vmatmul.mubr.f32.gmra.mrb[0].mxu0 %v253
      %v343 = vpop.f32.mrb[0].mxu0
      %v344 = vadd.f32 %v275, %v343
      %v345 = vpop.f32.mrb[0].mxu0
      %346 = vdwg.mxu0
      %347 = vxpose.xlu0.b32.start [1/16] %v344, 128
      %348 = vxpose.xlu0.b32.cont [2/16] 0.0, 128
      %349 = vxpose.xlu0.b32.cont [3/16] 0.0, 128
      %350 = vxpose.xlu0.b32.cont [4/16] 0.0, 128
      %351 = vxpose.xlu0.b32.cont [5/16] 0.0, 128
      %352 = vxpose.xlu0.b32.cont [6/16] 0.0, 128
      %353 = vxpose.xlu0.b32.cont [7/16] 0.0, 128
      %354 = vxpose.xlu0.b32.cont [8/16] 0.0, 128
      %355 = vxpose.xlu0.b32.cont [9/16] 0.0, 128
      %356 = vxpose.xlu0.b32.cont [10/16] 0.0, 128
      %357 = vxpose.xlu0.b32.cont [11/16] 0.0, 128
      %358 = vxpose.xlu0.b32.cont [12/16] 0.0, 128
      %359 = vxpose.xlu0.b32.cont [13/16] 0.0, 128
      %360 = vxpose.xlu0.b32.cont [14/16] 0.0, 128
      %361 = vxpose.xlu0.b32.cont [15/16] 0.0, 128
      %362 = vxpose.xlu0.b32.end [16/16] 0.0, 128
      %v363 = vpop.trf.xlu0
      %v364 = vpop.trf.xlu0
      %v365 = vpop.trf.xlu0
      %v366 = vpop.trf.xlu0
      %v367 = vpop.trf.xlu0
      %v368 = vpop.trf.xlu0
      %v369 = vpop.trf.xlu0
      %v370 = vpop.trf.xlu0
      %v371 = vpop.trf.xlu0
      %v372 = vpop.trf.xlu0
      %v373 = vpop.trf.xlu0
      %v374 = vpop.trf.xlu0
      %v375 = vpop.trf.xlu0
      %v376 = vpop.trf.xlu0
      %v377 = vpop.trf.xlu0
      %v378 = vpop.trf.xlu0
      %v379 = vxor.u32 %v363, 2147483648
      %v380 = vxor.u32 %v364, 2147483648
      %v381 = vxor.u32 %v365, 2147483648
      %v382 = vxor.u32 %v366, 2147483648
      %v383 = vmul.f32 %v379, 1.442695
      %v384 = vpow.pop %v383
      %v385 = vmul.f32 %v380, 1.442695
      %v386 = vpow.pop %v385
      %v387 = vmul.f32 %v381, 1.442695
      %v388 = vpow.pop %v387
      %v389 = vmul.f32 %v382, 1.442695
      %v390 = vpow.pop %v389
      %v391 = vadd.f32 %v384, 1.0
      %v392 = vadd.f32 %v386, 1.0
      %v393 = vadd.f32 %v388, 1.0
      %v394 = vadd.f32 %v390, 1.0
      %v395 = vrcp.pop %v391
      %v396 = vmul.f32 1.0, %v395
      %v397 = vrcp.pop %v392
      %v398 = vmul.f32 1.0, %v397
      %v399 = vrcp.pop %v393
      %v400 = vmul.f32 1.0, %v399
      %v401 = vrcp.pop %v394
      %v402 = vmul.f32 1.0, %v401
      %v403 = vmul.f32 %v363, %v396
      %v404 = vmul.f32 %v364, %v398
      %v405 = vmul.f32 %v365, %v400
      %v406 = vmul.f32 %v366, %v402
      %v407 = vld [vmem:[%s3] sm:$0xff]
      %v408 = vld [vmem:[%s3 + $0x8] sm:$0xff]
      %v409 = vld [vmem:[%s3 + $0x10] sm:$0xff]
      %v410 = vld [vmem:[%s3 + $0x18] sm:$0xff]
      %v411 = vld [vmem:[%s4] sm:$0xff]
      %v412 = vld [vmem:[%s4 + $0x8] sm:$0xff]
      %v413 = vld [vmem:[%s4 + $0x10] sm:$0xff]
      %v414 = vld [vmem:[%s4 + $0x18] sm:$0xff]
      %416 = vset.pattern.permute.xlu0 0
      %417 = vperm.xlu0 %416, %v411
      %v418 = vpop.permute.xlu0 %417
      %421 = vset.pattern.permute.xlu0 0
      %422 = vperm.xlu0 %421, %v412
      %v423 = vpop.permute.xlu0 %422
      %426 = vset.pattern.permute.xlu0 0
      %427 = vperm.xlu0 %426, %v413
      %v428 = vpop.permute.xlu0 %427
      %431 = vset.pattern.permute.xlu0 0
      %432 = vperm.xlu0 %431, %v414
      %v433 = vpop.permute.xlu0 %432
      %vm435 = vcmask 261120
      %v437 = vsel %vm435, %v407, 0
      %v440 = vsel %vm435, %v408, 0
      %v443 = vsel %vm435, %v409, 0
      %v446 = vsel %vm435, %v410, 0
      %448 = vmatprep.subr.mxu0 0.0
      %449 = vmatpush1.msra.mxu0 %v403
      %450 = vmatprep.subr.mxu0 0.0
      %451 = vmatpush1.msra.mxu0 %v404
      %452 = vmatprep.subr.mxu0 0.0
      %453 = vmatpush1.msra.mxu0 %v405
      %454 = vmatprep.subr.mxu0 0.0
      %455 = vmatpush1.msra.mxu0 %v406
      %456 = vmatprep.subr.mxu0 0.0
      %457 = vmatpush1.msra.mxu0 0.0
      %458 = vmatprep.subr.mxu0 0.0
      %459 = vmatpush1.msra.mxu0 0.0
      %460 = vmatprep.subr.mxu0 0.0
      %461 = vmatpush1.msra.mxu0 0.0
      %462 = vmatprep.subr.mxu0 0.0
      %463 = vmatpush1.msra.mxu0 0.0
      %464 = vmatprep.subr.mxu0 0.0
      %465 = vmatpush1.msra.mxu0 0.0
      %466 = vmatprep.subr.mxu0 0.0
      %467 = vmatpush1.msra.mxu0 0.0
      %468 = vmatprep.subr.mxu0 0.0
      %469 = vmatpush1.msra.mxu0 0.0
      %470 = vmatprep.subr.mxu0 0.0
      %471 = vmatpush1.msra.mxu0 0.0
      %472 = vmatprep.subr.mxu0 0.0
      %473 = vmatpush1.msra.mxu0 0.0
      %474 = vmatprep.subr.mxu0 0.0
      %475 = vmatpush1.msra.mxu0 0.0
      %476 = vmatprep.subr.mxu0 0.0
      %477 = vmatpush1.msra.mxu0 0.0
      %478 = vmatprep.subr.mxu0 0.0
      %479 = vmatpush1.msra.mxu0 0.0
      %480 = vmatprep.subr.mxu0 0.0
      %481 = vmatpush1.msra.mxu0 0.0
      %482 = vmatprep.subr.mxu0 0.0
      %483 = vmatpush1.msra.mxu0 0.0
      %484 = vmatprep.subr.mxu0 0.0
      %485 = vmatpush1.msra.mxu0 0.0
      %486 = vmatprep.subr.mxu0 0.0
      %487 = vmatpush1.msra.mxu0 0.0
      %488 = vmatprep.subr.mxu0 0.0
      %489 = vmatpush1.msra.mxu0 0.0
      %490 = vmatprep.subr.mxu0 0.0
      %491 = vmatpush1.msra.mxu0 0.0
      %492 = vmatprep.subr.mxu0 0.0
      %493 = vmatpush1.msra.mxu0 0.0
      %494 = vmatprep.subr.mxu0 0.0
      %495 = vmatpush1.msra.mxu0 0.0
      %496 = vmatprep.subr.mxu0 0.0
      %497 = vmatpush1.msra.mxu0 0.0
      %498 = vmatprep.subr.mxu0 0.0
      %499 = vmatpush1.msra.mxu0 0.0
      %500 = vmatprep.subr.mxu0 0.0
      %501 = vmatpush1.msra.mxu0 0.0
      %502 = vmatprep.subr.mxu0 0.0
      %503 = vmatpush1.msra.mxu0 0.0
      %504 = vmatprep.subr.mxu0 0.0
      %505 = vmatpush1.msra.mxu0 0.0
      %506 = vmatprep.subr.mxu0 0.0
      %507 = vmatpush1.msra.mxu0 0.0
      %508 = vmatprep.subr.mxu0 0.0
      %509 = vmatpush1.msra.mxu0 0.0
      %510 = vmatprep.subr.mxu0 0.0
      %511 = vmatpush1.msra.mxu0 0.0
      %512 = vmatprep.mubr.f32.mxu0 0.0
      %513 = vmatmul.mubr.f32.gmra.mrb[0].mxu0 %v437
      %v514 = vpop.f32.mrb[0].mxu0
      %v515 = vadd.f32 %v418, %v514
      %v516 = vpop.f32.mrb[0].mxu0
      %517 = vmatprep.mubr.f32.mxu0 0.0
      %518 = vmatmul.mubr.f32.gmra.mrb[0].mxu0 %v440
      %v519 = vpop.f32.mrb[0].mxu0
      %v520 = vadd.f32 %v423, %v519
      %v521 = vpop.f32.mrb[0].mxu0
      %522 = vmatprep.mubr.f32.mxu0 0.0
      %523 = vmatmul.mubr.f32.gmra.mrb[0].mxu0 %v443
      %v524 = vpop.f32.mrb[0].mxu0
      %v525 = vadd.f32 %v428, %v524
      %v526 = vpop.f32.mrb[0].mxu0
      %527 = vmatprep.mubr.f32.mxu0 0.0
      %528 = vmatmul.mubr.f32.gmra.mrb[0].mxu0 %v446
      %v529 = vpop.f32.mrb[0].mxu0
      %v530 = vadd.f32 %v433, %v529
      %v531 = vpop.f32.mrb[0].mxu0
      %532 = vdwg.mxu0
      %vm533 = vcmask 64512
      %534 = vst.msk [vmem:[%s252] sm:$0xff] %vm533, %v515
      %535 = vst.msk [vmem:[%s252 + $0x8] sm:$0xff] %vm533, %v520
      %536 = vst.msk [vmem:[%s252 + $0x10] sm:$0xff] %vm533, %v525
      %537 = vst.msk [vmem:[%s252 + $0x18] sm:$0xff] %vm533, %v530
      %p538 = scmp.lt.s32.totalorder %s20, 1
      %s539 = scalar_select %p538, %s20, 1
      %p540 = scmp.lt.s32.totalorder %s21, 0
      %s541 = scalar_select %p540, %s21, 0
      %s542 = smul.addr %s539, 4
      %s543 = sadd.s32 %s541, %s542
      %s544 = smul.addr %s543, 8
      %s545 = scalar_lea.vmem %s5, %s544
      // Predicated region
      $region41: #{tpu_custom_call.1} parent=39 // pred_check
        %p546 = pneg %p160
      $region42: #{tpu_custom_call.1} parent=39 // pred_check_branch
        %548 = sbr.rel (%p546) target = $region44
      $region43: #{tpu_custom_call.1} parent=39 // pred_region
        _
      $region44: #{tpu_custom_call.1} parent=39 // pred_fallthru
        _
    $region40: #{tpu_custom_call.1} parent=5 // pred_fallthru
      _
    %p549 = scmp.le.s32.totalorder 2, %s11
    // Predicated region
    $region45: #{tpu_custom_call.1} parent=5 // pred_check
      %p550 = pneg %p549
    $region46: #{tpu_custom_call.1} parent=5 // pred_check_branch
      %552 = sbr.rel (%p550) target = $region48
    $region47: #{tpu_custom_call.1} parent=5 // pred_region
      %s553 = ssub.s32 %s11, 2
      // Predicated region
      $region49: #{tpu_custom_call.1} parent=47 // pred_check
        %p554 = pneg %p166
      $region50: #{tpu_custom_call.1} parent=47 // pred_check_branch
        %556 = sbr.rel (%p554) target = $region52
      $region51: #{tpu_custom_call.1} parent=47 // pred_region
        %p557 = scmp.lt.s32.totalorder %s22, 1
        %s558 = scalar_select %p557, %s22, 1
        %p559 = scmp.lt.s32.totalorder %s23, 0
        %s560 = scalar_select %p559, %s23, 0
        %s561 = smul.addr %s558, 4
        %s562 = sadd.s32 %s560, %s561
        %s563 = smul.addr %s562, 8
        %s564 = scalar_lea.vmem %s5, %s563
      $region52: #{tpu_custom_call.1} parent=47 // pred_fallthru
        _
    $region48: #{tpu_custom_call.1} parent=5 // pred_fallthru
      _
  $region6: #{tpu_custom_call.1} parent=0 // loop_footer
    %s15 = sadd.s32 1, %s11
  $region7: #{tpu_custom_call.1} parent=0 // loop_footer_branch
    %10 = sbr.rel target = $region3
  $region8: #{tpu_custom_call.1} parent=0 // loop_exit
    _

</llo_original>
